<compile_context>
chip_gen: v7x
topology: tpu7x:2x2x1
jax: 0.10.0
libtpu: 0.0.40
codegen_flags: <defaults>
</compile_context>

<pallas_src>
import functools

import jax
import jax.numpy as jnp
from jax.experimental import pallas as pl
from jax.experimental.pallas import tpu as pltpu


# ---------------------------------------------------------------------------
# Path A: pixel-wise cross-entropy with ignore_index, mean over valid pixels.
# Grid = (N, num_pixel_tiles).  Block layout: logits (1, C, T), target (1,1,T).
# ---------------------------------------------------------------------------
def _ce_kernel(logits_ref, target_ref, loss_ref, sum_sc, cnt_sc, *,
               ignore_index, hw):
    i = pl.program_id(0)
    j = pl.program_id(1)

    @pl.when(jnp.logical_and(i == 0, j == 0))
    def _():
        sum_sc[...] = jnp.zeros_like(sum_sc)
        cnt_sc[...] = jnp.zeros_like(cnt_sc)

    logits = logits_ref[0].astype(jnp.float32)          # (C, T)  classes on sublanes
    tgt = target_ref[0]                                 # (1, T)  lane-dense int32
    c, t = logits.shape

    # One-hot pick of the target-class logit (no dynamic gather on TPU).
    class_ids = jax.lax.broadcasted_iota(jnp.int32, (c, t), 0)
    onehot = (class_ids == tgt).astype(jnp.float32)     # (C, T)
    picked = jnp.sum(logits * onehot, axis=0, keepdims=True)          # (1, T)

    # Max-stabilized logsumexp over the class (sublane) axis.
    m = jnp.max(logits, axis=0, keepdims=True)
    lse = m + jnp.log(jnp.sum(jnp.exp(logits - m), axis=0, keepdims=True))

    # Valid mask: not ignore_index AND inside the real pixel range (tail tile).
    pos = j * t + jax.lax.broadcasted_iota(jnp.int32, (1, t), 1)
    valid = jnp.logical_and(tgt != ignore_index, pos < hw)            # (1, T)

    # Element-wise (VPU) accumulation; scalar reduce deferred to the epilogue.
    sum_sc[...] += jnp.where(valid, lse - picked, 0.0)
    cnt_sc[...] += valid.astype(jnp.float32)

    @pl.when(jnp.logical_and(i == pl.num_programs(0) - 1,
                             j == pl.num_programs(1) - 1))
    def _():
        total = jnp.sum(sum_sc[...], keepdims=True)     # (1, 1)
        count = jnp.sum(cnt_sc[...], keepdims=True)     # (1, 1)
        # NOTE: if every pixel is ignore_index, count == 0 -> NaN/inf, which
        # matches nn.CrossEntropyLoss behaviour in the same situation.
        loss_ref[...] = total / count


def seg_cross_entropy_loss(predict, target, ignore_index=-1, tile_hw=8192):
    """nn.CrossEntropyLoss(ignore_index=...) on NCHW logits / NHW int targets."""
    n, c, h, w = predict.shape
    hw = h * w
    if hw <= tile_hw:
        tile_hw = hw                       # single (full-width) tile per image
    grid_t = pl.cdiv(hw, tile_hw)

    logits = predict.reshape(n, c, hw)                     # free reshape (no transpose)
    tgt = target.reshape(n, 1, hw).astype(jnp.int32)       # lane-dense targets

    kernel = functools.partial(_ce_kernel, ignore_index=ignore_index, hw=hw)
    loss = pl.pallas_call(
        kernel,
        out_shape=jax.ShapeDtypeStruct((1, 1), jnp.float32),
        grid_spec=pltpu.PrefetchScalarGridSpec(
            num_scalar_prefetch=0,
            grid=(n, grid_t),
            in_specs=[pl.BlockSpec((1, c, tile_hw), lambda i, j: (i, 0, j)),
                      pl.BlockSpec((1, 1, tile_hw), lambda i, j: (i, 0, j))],
            out_specs=pl.BlockSpec((1, 1), lambda i, j: (0, 0)),
            scratch_shapes=[pltpu.VMEM((1, tile_hw), jnp.float32),
                            pltpu.VMEM((1, tile_hw), jnp.float32)]),
        compiler_params=pltpu.CompilerParams(
            dimension_semantics=("arbitrary", "arbitrary")),
    )(logits, tgt)
    return loss[0, 0]


# ---------------------------------------------------------------------------
# Path B: BCE(sigmoid(predict), class-presence vector).  The presence vector
# (torch.histc > 0, which ignores values outside [0, nclass-1], e.g. -1) is
# computed inside the kernel by streaming target tiles -- no (N,H,W,C)
# intermediate.  log(sigmoid(p)) = -softplus(-p); log(1-sigmoid(p)) =
# -softplus(p); nn.BCELoss clamps log terms at -100 -> clamp softplus at 100.
# ---------------------------------------------------------------------------
def _bce_presence_kernel(predict_ref, target_ref, loss_ref, pres_sc, loss_sc, *,
                         hw, denom):
    i = pl.program_id(0)
    j = pl.program_id(1)
    nt = pl.num_programs(1)

    @pl.when(jnp.logical_and(i == 0, j == 0))
    def _():
        loss_sc[...] = jnp.zeros_like(loss_sc)

    @pl.when(j == 0)
    def _():
        pres_sc[...] = jnp.zeros_like(pres_sc)

    tgt = target_ref[0]                                  # (1, T) int32
    c, t = pres_sc.shape
    class_ids = jax.lax.broadcasted_iota(jnp.int32, (c, t), 0)
    pos = j * t + jax.lax.broadcasted_iota(jnp.int32, (1, t), 1)
    match = jnp.logical_and(class_ids == tgt, pos < hw)  # (C, T)
    # Element-wise presence accumulation; lane reduce deferred to j == last.
    pres_sc[...] = jnp.maximum(pres_sc[...], match.astype(jnp.float32))

    @pl.when(j == nt - 1)
    def _():
        tv = jnp.max(pres_sc[...], axis=1, keepdims=True)            # (C, 1)
        p = predict_ref[0].astype(jnp.float32)                        # (C, 1)
        softplus_p = jnp.maximum(p, 0.0) + jnp.log(1.0 + jnp.exp(-jnp.abs(p)))
        softplus_np = softplus_p - p
        per = (tv * jnp.minimum(softplus_np, 100.0)
               + (1.0 - tv) * jnp.minimum(softplus_p, 100.0))
        loss_sc[...] += jnp.sum(per, keepdims=True)

    @pl.when(jnp.logical_and(i == pl.num_programs(0) - 1, j == nt - 1))
    def _():
        loss_ref[...] = loss_sc[...] / denom


def bce_presence_loss(predict, target, tile_hw=8192):
    """BCELoss(sigmoid(predict), get_batch_label_vector(target))."""
    b, nclass = predict.shape
    n, h, w = target.shape
    hw = h * w
    if hw <= tile_hw:
        tile_hw = hw
    grid_t = pl.cdiv(hw, tile_hw)

    pred3 = predict.reshape(b, nclass, 1)                  # free reshape
    tgt3 = target.reshape(n, 1, hw).astype(jnp.int32)

    kernel = functools.partial(_bce_presence_kernel, hw=hw,
                               denom=float(b * nclass))
    loss = pl.pallas_call(
        kernel,
        out_shape=jax.ShapeDtypeStruct((1, 1), jnp.float32),
        grid_spec=pltpu.PrefetchScalarGridSpec(
            num_scalar_prefetch=0,
            grid=(b, grid_t),
            in_specs=[pl.BlockSpec((1, nclass, 1), lambda i, j: (i, 0, 0)),
                      pl.BlockSpec((1, 1, tile_hw), lambda i, j: (i, 0, j))],
            out_specs=pl.BlockSpec((1, 1), lambda i, j: (0, 0)),
            scratch_shapes=[pltpu.VMEM((nclass, tile_hw), jnp.float32),
                            pltpu.VMEM((1, 1), jnp.float32)]),
        compiler_params=pltpu.CompilerParams(
            dimension_semantics=("arbitrary", "arbitrary")),
    )(pred3, tgt3)
    return loss[0, 0]


# ---------------------------------------------------------------------------
# Module wrappers
# ---------------------------------------------------------------------------
class OneLoss:
    def __init__(self, OHEM=False, ignore_index=-1):
        self.ignore_index = ignore_index
        self.OHEM = OHEM
        # TODO(synk): OHEM hard-example mining branch (CPU numpy argsort-based
        # pixel selection + fixed 19-class weight vector) not ported; the
        # default (non-OHEM) CrossEntropyLoss path is implemented.

    def __call__(self, predict, target, do_OHEM=False):
        if predict.ndim == 4:
            return seg_cross_entropy_loss(predict, target, self.ignore_index)
        elif predict.ndim == 2:
            return bce_presence_loss(predict, target)
        else:
            raise Exception('Wrong output size.')


class SegmentationLosses:
    """Default-config forward of the PyTorch SegmentationLosses module."""

    def __init__(self, DS=False, CTF=False, se_loss=False, se_weight=0.2,
                 nclass=-1, aux=False, aux_weight=0.4, weight=None,
                 ignore_index=-1, OHEM=False):
        self.DS, self.CTF = DS, CTF
        self.se_loss, self.aux = se_loss, aux
        self.se_weight, self.aux_weight = se_weight, aux_weight
        self.criterion = OneLoss(OHEM, ignore_index)

    def __call__(self, *inputs):
        if self.CTF or self.DS:
            preds, target = inputs[:-1], inputs[-1]
            weights = ([0.5 ** i for i in range(len(preds))] if self.DS
                       else [1.0] * len(preds))
            # TODO(synk): do_OHEM=True on the first head not ported (see OneLoss).
            loss = weights[0] * self.criterion(preds[0], target)
            for wgt, p in zip(weights[1:], preds[1:]):
                loss = loss + wgt * self.criterion(p, target)
            return loss
        if not self.se_loss and not self.aux:
            return self.criterion(*inputs)
        elif not self.se_loss:
            preds, target = inputs[:-1], inputs[-1]
            loss = self.criterion(preds[0], target)
            for p in preds[1:]:
                loss = loss + self.aux_weight * self.criterion(p, target)
            return loss
        elif not self.aux:
            pred, se_pred, target = inputs
            return (self.criterion(pred, target)
                    + self.se_weight * bce_presence_loss(se_pred, target))
        else:
            pred1, se_pred, pred2, target = inputs
            return (self.criterion(pred1, target)
                    + self.aux_weight * self.criterion(pred2, target)
                    + self.se_weight * bce_presence_loss(se_pred, target))


# ---------------------------------------------------------------------------
# Plain-JAX references for verification
# ---------------------------------------------------------------------------
def _ref_ce(predict, target, ignore_index=-1):
    n, c, h, w = predict.shape
    logits = jnp.transpose(predict, (0, 2, 3, 1)).reshape(-1, c)
    t = target.reshape(-1)
    lse = jax.scipy.special.logsumexp(logits, axis=-1)
    picked = jnp.take_along_axis(
        logits, jnp.clip(t, 0, c - 1)[:, None], axis=-1)[:, 0]
    valid = (t != ignore_index).astype(jnp.float32)
    return jnp.sum((lse - picked) * valid) / jnp.sum(valid)


def _ref_bce(predict, target):
    b, c = predict.shape
    classes = jnp.arange(c, dtype=target.dtype)
    tvect = jnp.any(target[:, :, :, None] == classes[None, None, None, :],
                    axis=(1, 2)).astype(jnp.float32)
    s = jax.nn.sigmoid(predict)
    return jnp.mean(-(tvect * jnp.log(s) + (1.0 - tvect) * jnp.log(1.0 - s)))


if __name__ == "__main__":
    key = jax.random.PRNGKey(0)
    k1, k2, k3, k4, k5 = jax.random.split(key, 5)

    N, C, H, W = 2, 4, 16, 16
    predict4 = jax.random.normal(k1, (N, C, H, W), dtype=jnp.float32)
    # targets in [-1, C): -1 exercises ignore_index
    target = jax.random.randint(k2, (N, H, W), minval=-1, maxval=C, dtype=jnp.int32)
    predict2 = jax.random.normal(k3, (N, C), dtype=jnp.float32)

    seg_criterion = SegmentationLosses(ignore_index=-1)

    seg_loss = jax.block_until_ready(seg_criterion(predict4, target))
    cls_loss = jax.block_until_ready(seg_criterion(predict2, target))

    assert jnp.allclose(seg_loss, _ref_ce(predict4, target), rtol=1e-5, atol=1e-5), (
        seg_loss, _ref_ce(predict4, target))
    assert jnp.allclose(cls_loss, _ref_bce(predict2, target), rtol=1e-5, atol=1e-5), (
        cls_loss, _ref_bce(predict2, target))

    # Tail-masking path: spatial size not a multiple of the pixel tile.
    H2, W2 = 20, 20
    predict4b = jax.random.normal(k4, (N, C, H2, W2), dtype=jnp.float32)
    targetb = jax.random.randint(k5, (N, H2, W2), minval=-1, maxval=C,
                                 dtype=jnp.int32)
    seg_loss_b = jax.block_until_ready(
        seg_cross_entropy_loss(predict4b, targetb, ignore_index=-1, tile_hw=128))
    cls_loss_b = jax.block_until_ready(
        bce_presence_loss(predict2, targetb, tile_hw=128))

    assert jnp.allclose(seg_loss_b, _ref_ce(predict4b, targetb),
                        rtol=1e-5, atol=1e-5), (seg_loss_b, _ref_ce(predict4b, targetb))
    assert jnp.allclose(cls_loss_b, _ref_bce(predict2, targetb),
                        rtol=1e-5, atol=1e-5), (cls_loss_b, _ref_bce(predict2, targetb))

    print("KERNEL_OK")
</pallas_src>

<mosaic_0001>
module attributes {stable_mosaic.version = 11 : i64} {
  func.func @_ce_kernel(%arg0: i32, %arg1: i32, %arg2: memref<1x4x256xf32, #tpu.memory_space<vmem>>, %arg3: memref<1x1x256xi32, #tpu.memory_space<vmem>>, %arg4: memref<1x1xf32, #tpu.memory_space<vmem>>, %arg5: memref<1x256xf32, #tpu.memory_space<vmem>>, %arg6: memref<1x256xf32, #tpu.memory_space<vmem>>) attributes {dimension_semantics = [#tpu.dimension_semantics<arbitrary>, #tpu.dimension_semantics<arbitrary>], iteration_bounds = array<i64: 2, 1>, scalar_prefetch = 0 : i64, scratch_operands = 2 : i64, tpu.core_type = #tpu.core_type<tc>, window_params = [{transform_indices = @transform_0, window_bounds = array<i64: 1, 4, 256>}, {transform_indices = @transform_1, window_bounds = array<i64: 1, 1, 256>}, {pipeline_mode = #tpu.pipeline_mode<synchronous>, transform_indices = @transform_2, window_bounds = array<i64: 1, 1>}]} {
    %c0_i32 = arith.constant 0 : i32
    %0 = arith.cmpi eq, %arg0, %c0_i32 : i32
    %c0_i32_0 = arith.constant 0 : i32
    %1 = arith.cmpi eq, %arg1, %c0_i32_0 : i32
    %2 = arith.andi %0, %1 : i1
    %3 = arith.extui %2 : i1 to i32
    %c0_i32_1 = arith.constant 0 : i32
    %4 = arith.cmpi ne, %3, %c0_i32_1 : i32
    scf.if %4 {
      %cst_21 = arith.constant 0.000000e+00 : f32
      %51 = vector.broadcast %cst_21 : f32 to vector<1x256xf32>
      %c0_22 = arith.constant 0 : index
      %c0_23 = arith.constant 0 : index
      %52 = vector.load %arg5[%c0_22, %c0_23] : memref<1x256xf32, #tpu.memory_space<vmem>>, vector<1x256xf32>
      tpu.vector_store %arg5[%c0_22, %c0_23], %51 {strides = array<i32>} : memref<1x256xf32, #tpu.memory_space<vmem>>, vector<1x256xf32>,
      %cst_24 = arith.constant 0.000000e+00 : f32
      %53 = vector.broadcast %cst_24 : f32 to vector<1x256xf32>
      %c0_25 = arith.constant 0 : index
      %c0_26 = arith.constant 0 : index
      %54 = vector.load %arg6[%c0_25, %c0_26] : memref<1x256xf32, #tpu.memory_space<vmem>>, vector<1x256xf32>
      tpu.vector_store %arg6[%c0_25, %c0_26], %53 {strides = array<i32>} : memref<1x256xf32, #tpu.memory_space<vmem>>, vector<1x256xf32>,
    } else {
    }
    %c0 = arith.constant 0 : index
    %c0_2 = arith.constant 0 : index
    %c0_3 = arith.constant 0 : index
    %5 = vector.load %arg2[%c0, %c0_2, %c0_3] : memref<1x4x256xf32, #tpu.memory_space<vmem>>, vector<1x4x256xf32>
    %6 = vector.shape_cast %5 : vector<1x4x256xf32> to vector<4x256xf32>
    %c0_4 = arith.constant 0 : index
    %c0_5 = arith.constant 0 : index
    %c0_6 = arith.constant 0 : index
    %7 = vector.load %arg3[%c0_4, %c0_5, %c0_6] : memref<1x1x256xi32, #tpu.memory_space<vmem>>, vector<1x1x256xi32>
    %8 = vector.shape_cast %7 : vector<1x1x256xi32> to vector<1x256xi32>
    %9 = tpu.iota {dimensions = array<i32: 0>} : vector<4x256xi32>
    %10 = vector.broadcast %8 : vector<1x256xi32> to vector<4x256xi32>
    %11 = arith.cmpi eq, %9, %10 : vector<4x256xi32>
    %12 = arith.extui %11 : vector<4x256xi1> to vector<4x256xi32>
    %13 = arith.sitofp %12 : vector<4x256xi32> to vector<4x256xf32>
    %14 = arith.mulf %6, %13 : vector<4x256xf32>
    %cst = arith.constant dense<0.000000e+00> : vector<256xf32>
    %15 = vector.multi_reduction <add>, %14, %cst [0] : vector<4x256xf32> to vector<256xf32>
    %16 = vector.shape_cast %15 : vector<256xf32> to vector<1x256xf32>
    %cst_7 = arith.constant dense<0xFF800000> : vector<256xf32>
    %17 = vector.multi_reduction <maximumf>, %6, %cst_7 [0] : vector<4x256xf32> to vector<256xf32>
    %18 = vector.shape_cast %17 : vector<256xf32> to vector<1x256xf32>
    %19 = vector.broadcast %18 : vector<1x256xf32> to vector<4x256xf32>
    %20 = arith.subf %6, %19 : vector<4x256xf32>
    %21 = math.exp %20 : vector<4x256xf32>
    %cst_8 = arith.constant dense<0.000000e+00> : vector<256xf32>
    %22 = vector.multi_reduction <add>, %21, %cst_8 [0] : vector<4x256xf32> to vector<256xf32>
    %23 = vector.shape_cast %22 : vector<256xf32> to vector<1x256xf32>
    %24 = math.log %23 : vector<1x256xf32>
    %25 = arith.addf %18, %24 : vector<1x256xf32>
    %c256_i32 = arith.constant 256 : i32
    %26 = arith.muli %arg1, %c256_i32 : i32
    %27 = tpu.iota {dimensions = array<i32: 1>} : vector<1x256xi32>
    %28 = vector.broadcast %26 : i32 to vector<1x256xi32>
    %29 = arith.addi %28, %27 : vector<1x256xi32>
    %c-1_i32 = arith.constant -1 : i32
    %30 = vector.broadcast %c-1_i32 : i32 to vector<1x256xi32>
    %31 = arith.cmpi ne, %8, %30 : vector<1x256xi32>
    %c256_i32_9 = arith.constant 256 : i32
    %32 = vector.broadcast %c256_i32_9 : i32 to vector<1x256xi32>
    %33 = arith.cmpi slt, %29, %32 : vector<1x256xi32>
    %34 = arith.andi %31, %33 : vector<1x256xi1>
    %c0_10 = arith.constant 0 : index
    %c0_11 = arith.constant 0 : index
    %35 = vector.load %arg5[%c0_10, %c0_11] : memref<1x256xf32, #tpu.memory_space<vmem>>, vector<1x256xf32>
    %36 = arith.subf %25, %16 : vector<1x256xf32>
    %cst_12 = arith.constant 0.000000e+00 : f32
    %37 = vector.broadcast %cst_12 : f32 to vector<1x256xf32>
    %38 = arith.select %34, %36, %37 : vector<1x256xi1>, vector<1x256xf32>
    %39 = arith.addf %35, %38 : vector<1x256xf32>
    %c0_13 = arith.constant 0 : index
    %c0_14 = arith.constant 0 : index
    %40 = vector.load %arg5[%c0_13, %c0_14] : memref<1x256xf32, #tpu.memory_space<vmem>>, vector<1x256xf32>
    tpu.vector_store %arg5[%c0_13, %c0_14], %39 {strides = array<i32>} : memref<1x256xf32, #tpu.memory_space<vmem>>, vector<1x256xf32>,
    %c0_15 = arith.constant 0 : index
    %c0_16 = arith.constant 0 : index
    %41 = vector.load %arg6[%c0_15, %c0_16] : memref<1x256xf32, #tpu.memory_space<vmem>>, vector<1x256xf32>
    %42 = arith.extui %34 : vector<1x256xi1> to vector<1x256xi32>
    %43 = arith.sitofp %42 : vector<1x256xi32> to vector<1x256xf32>
    %44 = arith.addf %41, %43 : vector<1x256xf32>
    %c0_17 = arith.constant 0 : index
    %c0_18 = arith.constant 0 : index
    %45 = vector.load %arg6[%c0_17, %c0_18] : memref<1x256xf32, #tpu.memory_space<vmem>>, vector<1x256xf32>
    tpu.vector_store %arg6[%c0_17, %c0_18], %44 {strides = array<i32>} : memref<1x256xf32, #tpu.memory_space<vmem>>, vector<1x256xf32>,
    %c1_i32 = arith.constant 1 : i32
    %46 = arith.cmpi eq, %arg0, %c1_i32 : i32
    %c0_i32_19 = arith.constant 0 : i32
    %47 = arith.cmpi eq, %arg1, %c0_i32_19 : i32
    %48 = arith.andi %46, %47 : i1
    %49 = arith.extui %48 : i1 to i32
    %c0_i32_20 = arith.constant 0 : i32
    %50 = arith.cmpi ne, %49, %c0_i32_20 : i32
    scf.if %50 {
      %c0_21 = arith.constant 0 : index
      %c0_22 = arith.constant 0 : index
      %51 = vector.load %arg5[%c0_21, %c0_22] : memref<1x256xf32, #tpu.memory_space<vmem>>, vector<1x256xf32>
      %52 = vector.shape_cast %51 : vector<1x256xf32> to vector<1x1x256xf32>
      %cst_23 = arith.constant dense<0.000000e+00> : vector<1xf32>
      %53 = vector.multi_reduction <add>, %52, %cst_23 [1, 2] : vector<1x1x256xf32> to vector<1xf32>
      %54 = vector.shape_cast %53 : vector<1xf32> to vector<1x1x1xf32>
      %55 = vector.extract %54[0, 0, 0] : f32 from vector<1x1x1xf32>
      %56 = vector.broadcast %55 : f32 to vector<1x1xf32>
      %c0_24 = arith.constant 0 : index
      %c0_25 = arith.constant 0 : index
      %57 = vector.load %arg6[%c0_24, %c0_25] : memref<1x256xf32, #tpu.memory_space<vmem>>, vector<1x256xf32>
      %58 = vector.shape_cast %57 : vector<1x256xf32> to vector<1x1x256xf32>
      %cst_26 = arith.constant dense<0.000000e+00> : vector<1xf32>
      %59 = vector.multi_reduction <add>, %58, %cst_26 [1, 2] : vector<1x1x256xf32> to vector<1xf32>
      %60 = vector.shape_cast %59 : vector<1xf32> to vector<1x1x1xf32>
      %61 = vector.extract %60[0, 0, 0] : f32 from vector<1x1x1xf32>
      %62 = vector.broadcast %61 : f32 to vector<1x1xf32>
      %63 = arith.divf %56, %62 : vector<1x1xf32>
      %c0_27 = arith.constant 0 : index
      %c0_28 = arith.constant 0 : index
      %64 = vector.load %arg4[%c0_27, %c0_28] : memref<1x1xf32, #tpu.memory_space<vmem>>, vector<1x1xf32>
      tpu.vector_store %arg4[%c0_27, %c0_28], %63 {strides = array<i32>} : memref<1x1xf32, #tpu.memory_space<vmem>>, vector<1x1xf32>,
    } else {
    }
    return
  }
  func.func @transform_0(%arg0: i32, %arg1: i32) -> (i32, i32, i32) {
    %c0_i32 = arith.constant 0 : i32
    %c0_i32_0 = arith.constant 0 : i32
    return %arg0, %c0_i32, %arg1 : i32, i32, i32
  }
  func.func @transform_1(%arg0: i32, %arg1: i32) -> (i32, i32, i32) {
    %c0_i32 = arith.constant 0 : i32
    %c0_i32_0 = arith.constant 0 : i32
    return %arg0, %c0_i32, %arg1 : i32, i32, i32
  }
  func.func @transform_2(%arg0: i32, %arg1: i32) -> (i32, i32) {
    %c0_i32 = arith.constant 0 : i32
    %c0_i32_0 = arith.constant 0 : i32
    %c0_i32_1 = arith.constant 0 : i32
    return %c0_i32, %c0_i32_0 : i32, i32
  }
}

</mosaic_0001>

<llo_original>
// kernel: tpu_custom_call.1
$region0: #{tpu_custom_call.1}
  #allocation0 [shape = 'u32[]', space=smem, size = 0x4, offset = 0x4, fixed_abs, tag = 'smem constant byte address 0x4 - core index']
  #allocation1 [shape = 'u32[144,128]{1,0:T(1,128)}', space=vmem, size = 0x12000, scoped, tag = 'internal scratch']
  #allocation2 [shape = 'f32[1,256]{1,0:T(1,128)}', space=vmem, size = 0x400, scoped, tag = 'scratch operand']
  #allocation3 [shape = 'f32[1,256]{1,0:T(1,128)}', space=vmem, size = 0x400, scoped, tag = 'scratch operand']
  %s0 = inlined_call_operand.hbm [shape: f32[2,4,256], index: 0, kind: input, shape index: {}]
  %s1 = inlined_call_operand.hbm [shape: s32[2,1,256], index: 1, kind: input, shape index: {}]
  %s2 = inlined_call_operand.hbm [shape: f32[1,1], index: 2, kind: output, shape index: {}]
  %s3 = sld [smem:[#allocation0]]
  $region57: #{tpu_custom_call.1} parent=0
    _
  %s5 = ssub.s32 1, %s3
  %s6 = scalar_select 0, %s5, %s3
  $region1: #{tpu_custom_call.1} parent=0
    #allocation4 [shape = 'u8[8192]{0}', space=vmem, size = 0x2000, scoped, tag = 'input window, operand 0']
    #allocation5 [shape = 's32[2]{0}', space=sflag, size = 0x8, scoped, tag = 'scoped memory for tpu_custom_call.1']
    #allocation6 [shape = 's32[2]{0}', space=sflag, size = 0x8, scoped, tag = 'scoped memory for tpu_custom_call.1']
    #allocation7 [shape = 'u8[2048]{0}', space=vmem, size = 0x800, scoped, tag = 'input window, operand 1']
    #allocation8 [shape = 's32[2]{0}', space=sflag, size = 0x8, scoped, tag = 'scoped memory for tpu_custom_call.1']
    #allocation9 [shape = 'u8[512]{0}', space=vmem, size = 0x400, scoped, tag = 'output window, operand 0, single buffered']
    %7 = vsyncpa [#allocation5], 0
    %s8 = scalar_lea.sflag [#allocation5], 1
    %9 = vsyncpa %s8, 0
    %10 = vsyncpa [#allocation8], 0
    %s11 = scalar_lea.sflag [#allocation8], 1
    %12 = vsyncpa %s11, 0
    %13 = vsyncpa [#allocation6], 0
    loop: start=0, step=1, limit=4
    $region2: #{tpu_custom_call.1} parent=1 // loop_pre_header
      _
    $region3: #{tpu_custom_call.1} parent=1 // loop_header
      %s15 = sphi 0, %s19
      %p16 = scmp.ge.s32.totalorder %s15, 4
      %s22 = sphi 0, %s34
      %s23 = sphi 0, %s30
      %s24 = sphi 0, %s22
      %s25 = sphi 0, %s23
      %s26 = sphi 0, %s24
      %s27 = sphi 0, %s25
      %s39 = sphi 0, %s41
      %s42 = sphi 0, %s39
      %s43 = sphi 0, %s42
      %s59 = sphi 0, %s43
      %s67 = sphi 0, %s69
      %s70 = sphi 0, %s67
      %s71 = sphi 0, %s70
      %s87 = sphi 0, %s71
      %s91 = sphi 0, %s91
      %s93 = sphi 0, %s91
      %s94 = sphi 0, %s93
      %s108 = sphi 0, %s94
    $region4: #{tpu_custom_call.1} parent=1 // loop_header_branch
      %18 = sbr.rel (%p16) target = $region8
    $region5: #{tpu_custom_call.1} parent=1 // loop_body
      %s20 = ssub.s32 %s15, 1
      %s21 = ssub.s32 %s15, 2
      %s28 = sadd.s32 1, %s23
      %p29 = scmp.ge.s32.totalorder %s28, 1
      %s30 = scalar_select %p29, 0, %s28
      %s31 = sadd.s32 1, %s22
      %s32 = scalar_select %p29, %s31, %s22
      %p33 = scmp.ge.s32.totalorder %s32, 2
      %s34 = scalar_select %p33, 0, %s32
      %s35 = ssub.s32 %s22, %s34
      %s36 = ssub.s32 %s23, %s30
      %s37 = sor.u32 %s35, %s36
      %p38 = scmp.eq.s32.totalorder %s37, 0
      %s40 = sadd.s32 %s39, 1
      %s41 = scalar_select %p38, %s39, %s40
      %p44 = pneg %p38
      %p45 = scmp.eq.s32.totalorder %s15, 1
      %p46 = por %p44, %p45
      %p47 = scmp.ne.s32.totalorder %s39, %s42
      %p48 = scmp.eq.s32.totalorder %s15, 0
      %p49 = por %p47, %p48
      %p50 = scmp.ne.s32.totalorder %s39, %s42
      %p51 = scmp.eq.s32.totalorder %s20, 1
      %p52 = por %p50, %p51
      %p53 = scmp.ne.s32.totalorder %s42, %s43
      %p54 = scmp.eq.s32.totalorder %s20, 0
      %p55 = por %p53, %p54
      %p56 = scmp.ne.s32.totalorder %s42, %s43
      %p57 = scmp.eq.s32.totalorder %s21, 1
      %p58 = por %p56, %p57
      %p60 = scmp.ne.s32.totalorder %s43, %s59
      %p61 = scmp.eq.s32.totalorder %s21, 0
      %p62 = por %p60, %p61
      %s63 = ssub.s32 %s22, %s34
      %s64 = ssub.s32 %s23, %s30
      %s65 = sor.u32 %s63, %s64
      %p66 = scmp.eq.s32.totalorder %s65, 0
      %s68 = sadd.s32 %s67, 1
      %s69 = scalar_select %p66, %s67, %s68
      %p72 = pneg %p66
      %p73 = scmp.eq.s32.totalorder %s15, 1
      %p74 = por %p72, %p73
      %p75 = scmp.ne.s32.totalorder %s67, %s70
      %p76 = scmp.eq.s32.totalorder %s15, 0
      %p77 = por %p75, %p76
      %p78 = scmp.ne.s32.totalorder %s67, %s70
      %p79 = scmp.eq.s32.totalorder %s20, 1
      %p80 = por %p78, %p79
      %p81 = scmp.ne.s32.totalorder %s70, %s71
      %p82 = scmp.eq.s32.totalorder %s20, 0
      %p83 = por %p81, %p82
      %p84 = scmp.ne.s32.totalorder %s70, %s71
      %p85 = scmp.eq.s32.totalorder %s21, 1
      %p86 = por %p84, %p85
      %p88 = scmp.ne.s32.totalorder %s71, %s87
      %p89 = scmp.eq.s32.totalorder %s21, 0
      %p90 = por %p88, %p89
      %s92 = sadd.s32 %s91, 1
      %p95 = scmp.eq.s32.totalorder %s15, 1
      %p96 = scmp.ne.s32.totalorder %s91, %s93
      %p97 = scmp.eq.s32.totalorder %s15, 0
      %p98 = por %p96, %p97
      %p99 = scmp.ne.s32.totalorder %s91, %s93
      %p100 = scmp.eq.s32.totalorder %s20, 1
      %p101 = por %p99, %p100
      %p102 = scmp.ne.s32.totalorder %s93, %s94
      %p103 = scmp.eq.s32.totalorder %s20, 0
      %p104 = por %p102, %p103
      %p105 = scmp.ne.s32.totalorder %s93, %s94
      %p106 = scmp.eq.s32.totalorder %s21, 1
      %p107 = por %p105, %p106
      %p109 = scmp.ne.s32.totalorder %s94, %s108
      %p110 = scmp.eq.s32.totalorder %s21, 0
      %p111 = por %p109, %p110
      %p112 = scmp.le.s32.totalorder 1, %s15
      %p113 = scmp.lt.s32.totalorder %s15, 3
      %p114 = pnand %p112, %p113
      %p115 = pneg %p114
      // Predicated region
      $region9: #{tpu_custom_call.1} parent=5 // pred_check
        _
      $region10: #{tpu_custom_call.1} parent=5 // pred_check_branch
        %117 = sbr.rel (%p114) target = $region12
      $region11: #{tpu_custom_call.1} parent=5 // pred_region
        %s118 = ssub.s32 %s15, 1
      $region12: #{tpu_custom_call.1} parent=5 // pred_fallthru
        _
      %p119 = scmp.lt.s32.totalorder %s15, 2
      // Predicated region
      $region13: #{tpu_custom_call.1} parent=5 // pred_check
        %p120 = pneg %p119
      $region14: #{tpu_custom_call.1} parent=5 // pred_check_branch
        %122 = sbr.rel (%p120) target = $region16
      $region15: #{tpu_custom_call.1} parent=5 // pred_region
        // Predicated region
        $region17: #{tpu_custom_call.1} parent=15 // pred_check
          %p123 = pneg %p49
        $region18: #{tpu_custom_call.1} parent=15 // pred_check_branch
          %125 = sbr.rel (%p123) target = $region20
        $region19: #{tpu_custom_call.1} parent=15 // pred_region
          %s126 = sand.u32 %s39, 1
          %s127 = scalar_lea.sflag [#allocation5], %s126
          %s128 = sand.u32 %s39, 1
          %s129 = smul.addr %s128, 8
          %s130 = scalar_lea.vmem [#allocation4], %s129
          %s131 = smul.u32 2, %s23
          %s133 = ssub.s32 128, 128
          %134 = vsyncadd %s127, %s133
          %s135 = smul.addr %s22, 2
          %s136 = sadd.s32 %s131, %s135
          %s137 = smul.addr %s136, 64
          %s138 = scalar_lea.hbm %s0, %s137
          %s140 = sshll.u32 %s130, 4
          %s141 = int_to_ptr.vmem [resolvable:$true] %s140
          %143 = dma.hbm_to_vmem [thread:$0]  %s138, 128, %s141, %s127
        $region20: #{tpu_custom_call.1} parent=15 // pred_fallthru
          _
        // Predicated region
        $region21: #{tpu_custom_call.1} parent=15 // pred_check
          %p144 = pneg %p77
        $region22: #{tpu_custom_call.1} parent=15 // pred_check_branch
          %146 = sbr.rel (%p144) target = $region24
        $region23: #{tpu_custom_call.1} parent=15 // pred_region
          %s147 = sand.u32 %s67, 1
          %s148 = scalar_lea.sflag [#allocation8], %s147
          %s149 = sand.u32 %s67, 1
          %s150 = smul.addr %s149, 2
          %s151 = scalar_lea.vmem [#allocation7], %s150
          %s152 = smul.u32 2, %s23
          %s154 = ssub.s32 32, 32
          %155 = vsyncadd %s148, %s154
          %s156 = smul.addr %s22, 2
          %s157 = sadd.s32 %s152, %s156
          %s158 = smul.addr %s157, 16
          %s159 = scalar_lea.hbm %s1, %s158
          %s161 = sshll.u32 %s151, 4
          %s162 = int_to_ptr.vmem [resolvable:$true] %s161
          %164 = dma.hbm_to_vmem [thread:$0]  %s159, 32, %s162, %s148
        $region24: #{tpu_custom_call.1} parent=15 // pred_fallthru
          _
      $region16: #{tpu_custom_call.1} parent=5 // pred_fallthru
        _
      %p165 = scmp.le.s32.totalorder 1, %s15
      %p166 = scmp.lt.s32.totalorder %s15, 3
      %p167 = pnand %p165, %p166
      %p168 = pneg %p167
      // Predicated region
      $region25: #{tpu_custom_call.1} parent=5 // pred_check
        _
      $region26: #{tpu_custom_call.1} parent=5 // pred_check_branch
        %170 = sbr.rel (%p167) target = $region28
      $region27: #{tpu_custom_call.1} parent=5 // pred_region
        %s171 = ssub.s32 %s15, 1
        %s172 = sand.u32 %s42, 1
        %s173 = scalar_lea.sflag [#allocation5], %s172
        %s174 = sand.u32 %s42, 1
        %s175 = smul.addr %s174, 8
        %s176 = scalar_lea.vmem [#allocation4], %s175
        // Predicated region
        $region29: #{tpu_custom_call.1} parent=27 // pred_check
          %p177 = pneg %p55
        $region30: #{tpu_custom_call.1} parent=27 // pred_check_branch
          %179 = sbr.rel (%p177) target = $region32
        $region31: #{tpu_custom_call.1} parent=27 // pred_region
          %180 = dma.done %s173, 128
        $region32: #{tpu_custom_call.1} parent=27 // pred_fallthru
          _
        %s181 = sand.u32 %s70, 1
        %s182 = scalar_lea.sflag [#allocation8], %s181
        %s183 = sand.u32 %s70, 1
        %s184 = smul.addr %s183, 2
        %s185 = scalar_lea.vmem [#allocation7], %s184
        // Predicated region
        $region33: #{tpu_custom_call.1} parent=27 // pred_check
          %p186 = pneg %p83
        $region34: #{tpu_custom_call.1} parent=27 // pred_check_branch
          %188 = sbr.rel (%p186) target = $region36
        $region35: #{tpu_custom_call.1} parent=27 // pred_region
          %189 = dma.done %s182, 32
        $region36: #{tpu_custom_call.1} parent=27 // pred_fallthru
          _
        %s190 = sand.u32 %s42, 1
        %s191 = scalar_lea.sflag [#allocation5], %s190
        %s192 = sand.u32 %s42, 1
        %s193 = smul.addr %s192, 8
        %s194 = scalar_lea.vmem [#allocation4], %s193
        %p195 = pneg %p55
        %p196 = pneg %p52
        %s197 = sand.u32 %s70, 1
        %s198 = scalar_lea.sflag [#allocation8], %s197
        %s199 = sand.u32 %s70, 1
        %s200 = smul.addr %s199, 2
        %s201 = scalar_lea.vmem [#allocation7], %s200
        %p202 = pneg %p83
        %p203 = pneg %p80
        %p204 = pneg %p104
        %p205 = pneg %p101
        %s206 = smul.u32 2, %s25
        %s207 = smul.u32 2, %s25
        %p208 = scmp.eq.s32.totalorder %s24, 0
        %p209 = scmp.eq.s32.totalorder %s25, 0
        %p210 = pnand %p208, %p209
        %p211 = pneg %p210
        // Predicated region
        $region37: #{tpu_custom_call.1} parent=27 // pred_check
          _
        $region38: #{tpu_custom_call.1} parent=27 // pred_check_branch
          %213 = sbr.rel (%p210) target = $region40
        $region39: #{tpu_custom_call.1} parent=27 // pred_region
          %v214 = vlaneseq
          %vm215 = vcmp.ge.s32.totalorder %v214, 0
          %vm216 = vcmp.lt.s32.totalorder %v214, 256
          %vm217 = vmand %vm215, %vm216
          %218 = vst.msk [vmem:[#allocation2] sm:$0x3] %vm217, 0.0
          %219 = vst.msk [vmem:[#allocation3] sm:$0x3] %vm217, 0.0
        $region40: #{tpu_custom_call.1} parent=27 // pred_fallthru
          _
        %v220 = vld [vmem:[%s176] sm:$0xff]
        %v221 = vld [vmem:[%s185] sm:$0x3]
        %v222 = vlaneseq
        %v223 = vshrl.u32 %v222, 7
        %v224 = vlaneseq
        %v225 = vshrl.u32 %v224, 7
        %v226 = vsub.s32 0, %v225
        %v227 = vrot.slane %v221, %v226
        %v228 = vlaneseq
        %v229 = vshrl.u32 %v228, 7
        %v230 = vsub.s32 1, %v229
        %v231 = vrot.slane %v221, %v230
        %vm232 = vcmp.eq.s32.totalorder %v223, %v227
        %vm233 = vcmp.eq.s32.totalorder %v223, %v231
        %v234 = vsel %vm232, 1, 0
        %v235 = vsel %vm233, 1, 0
        %v236 = vcvt.s32.f32 %v234
        %v237 = vcvt.s32.f32 %v235
        %v240 = vcombine.low %v236, %v237
        %v242 = vmul.f32 %v220, %v240
        %v244 = vcombine.high %v242, %v242
        %vm246 = vcmask 1043456
        %v247 = vsel %vm246, %v242, 0.0
        %v248 = vrot.slane %v247, 4
        %v249 = vadd.f32 %v247, %v248
        %v250 = vrot.slane %v249, 2
        %v251 = vadd.f32 %v249, %v250
        %v252 = vrot.slane %v251, 1
        %v253 = vadd.f32 %v251, %v252
        %v254 = vsel %vm246, %v244, 0.0
        %v255 = vrot.slane %v254, 4
        %v256 = vadd.f32 %v254, %v255
        %v257 = vrot.slane %v256, 2
        %v258 = vadd.f32 %v256, %v257
        %v259 = vrot.slane %v258, 1
        %v260 = vadd.f32 %v258, %v259
        %v262 = vcombine.high %v220, %v220
        %v264 = vsel %vm246, %v220, -inf
        %v265 = vrot.slane %v264, 4
        %v266 = vmax.f32 %v264, %v265
        %v267 = vrot.slane %v266, 2
        %v268 = vmax.f32 %v266, %v267
        %v269 = vrot.slane %v268, 1
        %v270 = vmax.f32 %v268, %v269
        %v271 = vsel %vm246, %v262, -inf
        %v272 = vrot.slane %v271, 4
        %v273 = vmax.f32 %v271, %v272
        %v274 = vrot.slane %v273, 2
        %v275 = vmax.f32 %v273, %v274
        %v276 = vrot.slane %v275, 1
        %v277 = vmax.f32 %v275, %v276
        %v280 = vcombine.low %v270, %v277
        %v282 = vsub.f32 %v220, %v280
        %v283 = vmul.f32 %v282, 1.442695
        %v284 = vpow.pop %v283
        %v286 = vcombine.high %v284, %v284
        %v288 = vsel %vm246, %v284, 0.0
        %v289 = vrot.slane %v288, 4
        %v290 = vadd.f32 %v288, %v289
        %v291 = vrot.slane %v290, 2
        %v292 = vadd.f32 %v290, %v291
        %v293 = vrot.slane %v292, 1
        %v294 = vadd.f32 %v292, %v293
        %v295 = vsel %vm246, %v286, 0.0
        %v296 = vrot.slane %v295, 4
        %v297 = vadd.f32 %v295, %v296
        %v298 = vrot.slane %v297, 2
        %v299 = vadd.f32 %v297, %v298
        %v300 = vrot.slane %v299, 1
        %v301 = vadd.f32 %v299, %v300
        %v302 = vlog2.pop %v294
        %v303 = vmul.f32 %v302, 0.6931472
        %v304 = vlog2.pop %v301
        %v305 = vmul.f32 %v304, 0.6931472
        %v306 = vadd.f32 %v270, %v303
        %v307 = vadd.f32 %v277, %v305
        %s308 = smul.u32 %s25, 256
        %v309 = vlaneseq
        %v310 = vand.u32 %v309, 127
        %v311 = vadd.s32 %v310, 128
        %v312 = vstv %s308
        %v313 = vadd.s32 %v312, %v310
        %v314 = vadd.s32 %v312, %v311
        %vm315 = vcmp.ne.s32.totalorder %v221, 4294967295
        %vm316 = vcmp.lt.s32.totalorder %v313, 256
        %vm317 = vcmp.lt.s32.totalorder %v314, 256
        %v318 = vsel %vm316, 1, 0
        %v319 = vsel %vm317, 1, 0
        %v320 = vcombine.low %v318, %v319
        %v322 = vunpack.c.l.s4 1966171168
        %v323 = vunpack.c.0.s8 %v322
        %v324 = vlaneseq
        %v325 = vshrl.u32 %v324, 7
        %v326 = vsub.s32 %v323, %v325
        %v327 = vrot.slane %v320, %v326
        %v329 = vunpack.c.l.s4 1966171168
        %v330 = vunpack.c.0.s8 %v329
        %v331 = vlaneseq
        %v332 = vshrl.u32 %v331, 7
        %v333 = vsub.s32 %v330, %v332
        %v334 = vrot.slane %v327, %v333
        %vm335 = vcmp.ne.s32.totalorder %v334, 0
        %vm336 = vmand %vm315, %vm335
        %v337 = vld [vmem:[#allocation2] sm:$0x3]
        %v338 = vsub.f32 %v306, %v253
        %v339 = vsub.f32 %v307, %v260
        %v342 = vcombine.low %v338, %v339
        %v344 = vunpack.c.l.s4 1966171168
        %v345 = vunpack.c.0.s8 %v344
        %v346 = vlaneseq
        %v347 = vshrl.u32 %v346, 7
        %v348 = vsub.s32 %v345, %v347
        %v349 = vrot.slane %v342, %v348
        %v351 = vunpack.c.l.s4 1966171168
        %v352 = vunpack.c.0.s8 %v351
        %v353 = vlaneseq
        %v354 = vshrl.u32 %v353, 7
        %v355 = vsub.s32 %v352, %v354
        %v356 = vrot.slane %v349, %v355
        %v358 = vsel %vm336, %v356, 0.0
        %v359 = vadd.f32 %v337, %v358
        %v360 = vlaneseq
        %vm361 = vcmp.ge.s32.totalorder %v360, 0
        %vm362 = vcmp.lt.s32.totalorder %v360, 256
        %vm363 = vmand %vm361, %vm362
        %364 = vst.msk [vmem:[#allocation2] sm:$0x3] %vm363, %v359
        %v365 = vld [vmem:[#allocation3] sm:$0x3]
        %v366 = vsel %vm336, 1, 0
        %v367 = vcvt.s32.f32 %v366
        %v368 = vadd.f32 %v365, %v367
        %369 = vst.msk [vmem:[#allocation3] sm:$0x3] %vm363, %v368
        %p370 = scmp.eq.s32.totalorder %s24, 1
        %p371 = pnand %p370, %p209
        %p372 = pneg %p371
        // Predicated region
        $region41: #{tpu_custom_call.1} parent=27 // pred_check
          _
        $region42: #{tpu_custom_call.1} parent=27 // pred_check_branch
          %374 = sbr.rel (%p371) target = $region44
        $region43: #{tpu_custom_call.1} parent=27 // pred_region
          %v375 = vld [vmem:[#allocation2] sm:$0x3]
          %v377 = vlaneseq
          %v378 = vshrl.u32 %v377, 7
          %v379 = vsub.s32 0, %v378
          %v380 = vrot.slane %v375, %v379
          %v381 = vlaneseq
          %v382 = vshrl.u32 %v381, 7
          %v383 = vsub.s32 1, %v382
          %v384 = vrot.slane %v375, %v383
          %vm387 = vcmask 1040384
          %v388 = vsel %vm387, %v380, 0.0
          %v389 = vsel %vm387, %v384, 0.0
          %v390 = vadd.f32 %v388, %v389
          %391 = vadd.xlane.f32.xlu0 %v390
          %v392 = vpop.xlane.xlu0 %391
          %v393 = vrot.slane %v392, 4
          %v394 = vadd.f32 %v392, %v393
          %v395 = vrot.slane %v394, 2
          %v396 = vadd.f32 %v394, %v395
          %v397 = vrot.slane %v396, 1
          %v398 = vadd.f32 %v396, %v397
          %s399 = vtos %v398
          %v400 = vstv %s399
          %v401 = vld [vmem:[#allocation3] sm:$0x3]
          %v403 = vlaneseq
          %v404 = vshrl.u32 %v403, 7
          %v405 = vsub.s32 0, %v404
          %v406 = vrot.slane %v401, %v405
          %v407 = vlaneseq
          %v408 = vshrl.u32 %v407, 7
          %v409 = vsub.s32 1, %v408
          %v410 = vrot.slane %v401, %v409
          %v413 = vsel %vm387, %v406, 0.0
          %v414 = vsel %vm387, %v410, 0.0
          %v415 = vadd.f32 %v413, %v414
          %416 = vadd.xlane.f32.xlu0 %v415
          %v417 = vpop.xlane.xlu0 %416
          %v418 = vrot.slane %v417, 4
          %v419 = vadd.f32 %v417, %v418
          %v420 = vrot.slane %v419, 2
          %v421 = vadd.f32 %v419, %v420
          %v422 = vrot.slane %v421, 1
          %v423 = vadd.f32 %v421, %v422
          %s424 = vtos %v423
          %v425 = vstv %s424
          %v426 = vrcp.pop %v425
          %v427 = vmul.f32 %v400, %v426
          %vm428 = vcmask 0
          %429 = vst.msk [vmem:[#allocation9] sm:$0x1] %vm428, %v427
        $region44: #{tpu_custom_call.1} parent=27 // pred_fallthru
          _
        // Predicated region
        $region45: #{tpu_custom_call.1} parent=27 // pred_check
          %p430 = pneg %p101
        $region46: #{tpu_custom_call.1} parent=27 // pred_check_branch
          %432 = sbr.rel (%p430) target = $region48
        $region47: #{tpu_custom_call.1} parent=27 // pred_region
          %s434 = ssub.s32 16, 16
          %435 = vsyncadd [#allocation6], %s434
          %s437 = sshll.u32 [#allocation9], 4
          %s438 = int_to_ptr.vmem [resolvable:$true] %s437
          %440 = dma.vmem_to_hbm [thread:$0]  %s438, 16, %s2, [#allocation6]
        $region48: #{tpu_custom_call.1} parent=27 // pred_fallthru
          _
        // Predicated region
        $region49: #{tpu_custom_call.1} parent=27 // pred_check
          %p441 = pneg %p101
        $region50: #{tpu_custom_call.1} parent=27 // pred_check_branch
          %443 = sbr.rel (%p441) target = $region52
        $region51: #{tpu_custom_call.1} parent=27 // pred_region
          %444 = dma.done [#allocation6], 16
        $region52: #{tpu_custom_call.1} parent=27 // pred_fallthru
          _
      $region28: #{tpu_custom_call.1} parent=5 // pred_fallthru
        _
      %p445 = scmp.le.s32.totalorder 2, %s15
      // Predicated region
      $region53: #{tpu_custom_call.1} parent=5 // pred_check
        %p446 = pneg %p445
      $region54: #{tpu_custom_call.1} parent=5 // pred_check_branch
        %448 = sbr.rel (%p446) target = $region56
      $region55: #{tpu_custom_call.1} parent=5 // pred_region
        %s449 = ssub.s32 %s15, 2
      $region56: #{tpu_custom_call.1} parent=5 // pred_fallthru
        _
    $region6: #{tpu_custom_call.1} parent=1 // loop_footer
      %s19 = sadd.s32 1, %s15
    $region7: #{tpu_custom_call.1} parent=1 // loop_footer_branch
      %14 = sbr.rel target = $region3
    $region8: #{tpu_custom_call.1} parent=1 // loop_exit
      _
    %450 = vsyncpa [#allocation5], 1
    %s451 = scalar_lea.sflag [#allocation5], 1
    %452 = vsyncpa %s451, 1
    %453 = vsyncpa [#allocation8], 1
    %s454 = scalar_lea.sflag [#allocation8], 1
    %455 = vsyncpa %s454, 1
    %456 = vsyncpa [#allocation6], 1
    %s457 = scalar_lea.sflag [#allocation6], 1
    %458 = vsyncpa %s457, 1

</llo_original>
